<compile_context>
chip_gen: v5e
topology: v5e:2x2
jax: 0.10.0
libtpu: 0.0.40
codegen_flags: <defaults>
</compile_context>

<pallas_src>
import functools

import jax
import jax.numpy as jnp
from jax.experimental import pallas as pl
from jax.experimental.pallas import tpu as pltpu

_LANE = 128     # vreg lane width
_SUBLANE = 8    # vreg sublane width (f32)


def _round_up(n, m):
    return ((n + m - 1) // m) * m


def mlp_kernel(x_ref, w1_ref, b1_ref, w2_ref, b2_ref, o_ref):
    d_out = o_ref.shape[-1]
    # In-kernel bf16 cast of the streamed x tile (VPU slack, saves a wrapper HBM pass).
    x = x_ref[...].astype(jnp.bfloat16)
    # (TB, D_in) bf16 @ (D_in, H) bf16 -> f32 accumulation on the MXU.
    h = jnp.dot(x, w1_ref[...], preferred_element_type=jnp.float32)
    h = jnp.maximum(h + b1_ref[...], 0.0)                      # bias + ReLU in f32
    # Second matmul uses the lane-padded (H, 128) W2 resident in VMEM.
    y = jnp.dot(h.astype(jnp.bfloat16), w2_ref[...],
                preferred_element_type=jnp.float32)
    # Slice off the padding lanes and store a compact (TB, D_out) tile.
    o_ref[...] = (y[:, :d_out] + b2_ref[...]).astype(o_ref.dtype)


def prepare_params(w1, b1, w2, b2):
    """One-time weight prep: bf16 MXU operands + lane-pad W2 to a full 128-lane slab."""
    H, D_out = w2.shape
    D_out_p = _round_up(max(D_out, _LANE), _LANE)
    w1_bf = w1.astype(jnp.bfloat16)
    b1_f = jnp.asarray(b1, jnp.float32).reshape(1, -1)
    w2_p = jnp.zeros((H, D_out_p), jnp.bfloat16).at[:, :D_out].set(w2.astype(jnp.bfloat16))
    b2_f = jnp.asarray(b2, jnp.float32).reshape(1, -1)          # compact (1, D_out)
    return w1_bf, b1_f, w2_p, b2_f


@functools.partial(jax.jit, static_argnames=("tile_b",))
def net_forward(x, w1_bf, b1_f, w2_p, b2_f, *, tile_b=512):
    B, D_in = x.shape
    H = w1_bf.shape[1]
    D_out = b2_f.shape[1]
    D_out_p = w2_p.shape[1]

    # Batch tile: as large as tile_b for HBM efficiency, but capped near B/2 so the
    # grid has >= 2 steps whenever possible (keeps both v7x TensorCores busy).
    TB = min(tile_b, max(_SUBLANE, _round_up(pl.cdiv(B, 2), _SUBLANE)))
    grid = (pl.cdiv(B, TB),)   # ragged boundary block allowed; rows are independent

    out = pl.pallas_call(
        mlp_kernel,
        out_shape=jax.ShapeDtypeStruct((B, D_out), jnp.float32),
        grid_spec=pltpu.PrefetchScalarGridSpec(
            num_scalar_prefetch=0,
            grid=grid,
            in_specs=[
                pl.BlockSpec((TB, D_in), lambda i: (i, 0)),        # streamed f32 x tiles
                pl.BlockSpec((D_in, H), lambda i: (0, 0)),         # resident bf16 W1
                pl.BlockSpec((1, H), lambda i: (0, 0)),            # resident f32 b1
                pl.BlockSpec((H, D_out_p), lambda i: (0, 0)),      # resident bf16 W2 (lane-padded)
                pl.BlockSpec((1, D_out), lambda i: (0, 0)),        # resident f32 b2 (compact)
            ],
            out_specs=pl.BlockSpec((TB, D_out), lambda i: (i, 0)), # compact output
        ),
        compiler_params=pltpu.CompilerParams(
            # Independent batch tiles -> shardable across v7x's two TensorCores.
            dimension_semantics=("parallel",)),
    )(x, w1_bf, b1_f, w2_p, b2_f)
    return out


def init_params(key, input_dim, hidden, output_dim):
    # Mimics PyTorch nn.Linear default init: U(-1/sqrt(fan_in), 1/sqrt(fan_in))
    k1, k2, k3, k4 = jax.random.split(key, 4)
    bound1 = 1.0 / jnp.sqrt(input_dim)
    bound2 = 1.0 / jnp.sqrt(hidden)
    w1 = jax.random.uniform(k1, (input_dim, hidden), jnp.float32, -bound1, bound1)
    b1 = jax.random.uniform(k2, (1, hidden), jnp.float32, -bound1, bound1)
    w2 = jax.random.uniform(k3, (hidden, output_dim), jnp.float32, -bound2, bound2)
    b2 = jax.random.uniform(k4, (1, output_dim), jnp.float32, -bound2, bound2)
    return w1, b1, w2, b2


if __name__ == "__main__":
    key = jax.random.PRNGKey(0)
    kx, kp, kx2 = jax.random.split(key, 3)

    batch, input_dim, hidden, output_dim = 8, 32, 128, 16
    x = jax.random.normal(kx, (batch, input_dim), jnp.float32)
    w1, b1, w2, b2 = init_params(kp, input_dim, hidden, output_dim)
    params = prepare_params(w1, b1, w2, b2)   # one-time weight prep (hoisted out of forward)

    def ref_fwd(xx):
        return jnp.maximum(xx @ w1 + b1, 0.0) @ w2 + b2

    # Small shape consistent with the module (single grid step).
    out = net_forward(x, *params)
    jax.block_until_ready(out)
    assert out.shape == (batch, output_dim)
    # bf16 MXU operands -> loosened tolerance vs f32 reference.
    assert jnp.allclose(out, ref_fwd(x), atol=3e-2, rtol=3e-2)

    # Batched shape exercising multiple grid steps and a ragged boundary block.
    big_batch = 520
    xb = jax.random.normal(kx2, (big_batch, input_dim), jnp.float32)
    outb = net_forward(xb, *params)
    jax.block_until_ready(outb)
    assert outb.shape == (big_batch, output_dim)
    assert jnp.allclose(outb, ref_fwd(xb), atol=3e-2, rtol=3e-2)

    print("KERNEL_OK")
</pallas_src>

<mosaic_0001>
module attributes {stable_mosaic.version = 11 : i64} {
  func.func @mlp_kernel(%arg0: i32, %arg1: memref<8x32xf32, #tpu.memory_space<vmem>>, %arg2: memref<32x128xbf16, #tpu.memory_space<vmem>>, %arg3: memref<1x128xf32, #tpu.memory_space<vmem>>, %arg4: memref<128x128xbf16, #tpu.memory_space<vmem>>, %arg5: memref<1x16xf32, #tpu.memory_space<vmem>>, %arg6: memref<8x16xf32, #tpu.memory_space<vmem>>) attributes {dimension_semantics = [#tpu.dimension_semantics<parallel>], iteration_bounds = array<i64: 1>, scalar_prefetch = 0 : i64, scratch_operands = 0 : i64, tpu.core_type = #tpu.core_type<tc>, window_params = [{transform_indices = @transform_0, window_bounds = array<i64: 8, 32>}, {pipeline_mode = #tpu.pipeline_mode<synchronous>, transform_indices = @transform_1, window_bounds = array<i64: 32, 128>}, {pipeline_mode = #tpu.pipeline_mode<synchronous>, transform_indices = @transform_2, window_bounds = array<i64: 1, 128>}, {pipeline_mode = #tpu.pipeline_mode<synchronous>, transform_indices = @transform_3, window_bounds = array<i64: 128, 128>}, {pipeline_mode = #tpu.pipeline_mode<synchronous>, transform_indices = @transform_4, window_bounds = array<i64: 1, 16>}, {transform_indices = @transform_5, window_bounds = array<i64: 8, 16>}]} {
    %c0 = arith.constant 0 : index
    %c0_0 = arith.constant 0 : index
    %0 = vector.load %arg1[%c0, %c0_0] : memref<8x32xf32, #tpu.memory_space<vmem>>, vector<8x32xf32>
    %1 = arith.truncf %0 : vector<8x32xf32> to vector<8x32xbf16>
    %c0_1 = arith.constant 0 : index
    %c0_2 = arith.constant 0 : index
    %2 = vector.load %arg2[%c0_1, %c0_2] : memref<32x128xbf16, #tpu.memory_space<vmem>>, vector<32x128xbf16>
    %cst = arith.constant dense<0.000000e+00> : vector<8x128xf32>
    %3 = tpu.matmul %1, %2, %cst {dimension_numbers = #tpu.dot_dimension_numbers<[1], [0], [0], [1], [0, 0, 1, 1], [], []>} : vector<8x32xbf16>, vector<32x128xbf16>, vector<8x128xf32> -> vector<8x128xf32>
    %c0_3 = arith.constant 0 : index
    %c0_4 = arith.constant 0 : index
    %4 = vector.load %arg3[%c0_3, %c0_4] : memref<1x128xf32, #tpu.memory_space<vmem>>, vector<1x128xf32>
    %5 = vector.broadcast %4 : vector<1x128xf32> to vector<8x128xf32>
    %6 = arith.addf %3, %5 : vector<8x128xf32>
    %cst_5 = arith.constant 0.000000e+00 : f32
    %7 = vector.broadcast %cst_5 : f32 to vector<8x128xf32>
    %8 = arith.maximumf %6, %7 : vector<8x128xf32>
    %9 = arith.truncf %8 : vector<8x128xf32> to vector<8x128xbf16>
    %c0_6 = arith.constant 0 : index
    %c0_7 = arith.constant 0 : index
    %10 = vector.load %arg4[%c0_6, %c0_7] : memref<128x128xbf16, #tpu.memory_space<vmem>>, vector<128x128xbf16>
    %cst_8 = arith.constant dense<0.000000e+00> : vector<8x128xf32>
    %11 = tpu.matmul %9, %10, %cst_8 {dimension_numbers = #tpu.dot_dimension_numbers<[1], [0], [0], [1], [0, 0, 1, 1], [], []>} : vector<8x128xbf16>, vector<128x128xbf16>, vector<8x128xf32> -> vector<8x128xf32>
    %12 = vector.extract_strided_slice %11 {offsets = [0, 0], sizes = [8, 16], strides = [1, 1]} : vector<8x128xf32> to vector<8x16xf32>
    %c0_9 = arith.constant 0 : index
    %c0_10 = arith.constant 0 : index
    %13 = vector.load %arg5[%c0_9, %c0_10] : memref<1x16xf32, #tpu.memory_space<vmem>>, vector<1x16xf32>
    %14 = vector.broadcast %13 : vector<1x16xf32> to vector<8x16xf32>
    %15 = arith.addf %12, %14 : vector<8x16xf32>
    %c0_11 = arith.constant 0 : index
    %c0_12 = arith.constant 0 : index
    %16 = vector.load %arg6[%c0_11, %c0_12] : memref<8x16xf32, #tpu.memory_space<vmem>>, vector<8x16xf32>
    tpu.vector_store %arg6[%c0_11, %c0_12], %15 {strides = array<i32>} : memref<8x16xf32, #tpu.memory_space<vmem>>, vector<8x16xf32>,
    return
  }
  func.func @transform_0(%arg0: i32) -> (i32, i32) {
    %c0_i32 = arith.constant 0 : i32
    %c0_i32_0 = arith.constant 0 : i32
    return %arg0, %c0_i32 : i32, i32
  }
  func.func @transform_1(%arg0: i32) -> (i32, i32) {
    %c0_i32 = arith.constant 0 : i32
    %c0_i32_0 = arith.constant 0 : i32
    %c0_i32_1 = arith.constant 0 : i32
    return %c0_i32, %c0_i32_0 : i32, i32
  }
  func.func @transform_2(%arg0: i32) -> (i32, i32) {
    %c0_i32 = arith.constant 0 : i32
    %c0_i32_0 = arith.constant 0 : i32
    %c0_i32_1 = arith.constant 0 : i32
    return %c0_i32, %c0_i32_0 : i32, i32
  }
  func.func @transform_3(%arg0: i32) -> (i32, i32) {
    %c0_i32 = arith.constant 0 : i32
    %c0_i32_0 = arith.constant 0 : i32
    %c0_i32_1 = arith.constant 0 : i32
    return %c0_i32, %c0_i32_0 : i32, i32
  }
  func.func @transform_4(%arg0: i32) -> (i32, i32) {
    %c0_i32 = arith.constant 0 : i32
    %c0_i32_0 = arith.constant 0 : i32
    %c0_i32_1 = arith.constant 0 : i32
    return %c0_i32, %c0_i32_0 : i32, i32
  }
  func.func @transform_5(%arg0: i32) -> (i32, i32) {
    %c0_i32 = arith.constant 0 : i32
    %c0_i32_0 = arith.constant 0 : i32
    return %arg0, %c0_i32 : i32, i32
  }
}

</mosaic_0001>

<llo_original>
// kernel: net_forward.1
$region0: #{net_forward.1}
  #allocation0 [shape = 'u32[]', space=smem, size = 0x4, offset = 0x4, fixed_abs, tag = 'smem constant byte address 0x4 - core index']
  #allocation1 [shape = 'u32[72,128]{1,0:T(1,128)}', space=vmem, size = 0x9000, scoped, tag = 'internal scratch']
  %s0 = inlined_call_operand.hbm [shape: f32[8,32], index: 0, kind: input, shape index: {}]
  %s1 = inlined_call_operand.hbm [shape: bf16[32,128], index: 1, kind: input, shape index: {}]
  %s2 = inlined_call_operand.vmem [shape: f32[1,128], index: 2, kind: input, shape index: {}]
  %s3 = inlined_call_operand.hbm [shape: bf16[128,128], index: 3, kind: input, shape index: {}]
  %s4 = inlined_call_operand.vmem [shape: f32[1,16], index: 4, kind: input, shape index: {}]
  %s5 = inlined_call_operand.hbm [shape: f32[8,16], index: 5, kind: output, shape index: {}]
  %s6 = sld [smem:[#allocation0]]
  $region42: #{net_forward.1} parent=0
    _
  %s8 = ssub.s32 1, %s6
  %s9 = scalar_select 0, %s8, %s6
  $region1: #{net_forward.1} parent=0
    #allocation2 [shape = 'u8[4096]{0}', space=vmem, size = 0x1000, scoped, tag = 'input window, operand 0, single buffered']
    #allocation3 [shape = 's32[1]{0}', space=sflag, size = 0x4, scoped, tag = 'scoped memory for net_forward.1']
    #allocation4 [shape = 's32[1]{0}', space=sflag, size = 0x4, scoped, tag = 'scoped memory for net_forward.1']
    #allocation5 [shape = 'u8[8192]{0}', space=vmem, size = 0x2000, scoped, tag = 'input window, operand 1, single buffered']
    #allocation6 [shape = 's32[1]{0}', space=sflag, size = 0x4, scoped, tag = 'scoped memory for net_forward.1']
    #allocation7 [shape = 'u8[32768]{0}', space=vmem, size = 0x8000, scoped, tag = 'input window, operand 3, single buffered']
    #allocation8 [shape = 'u8[4096]{0}', space=vmem, size = 0x1000, scoped, tag = 'output window, operand 0, single buffered']
    %10 = vsyncpa [#allocation3], 0
    %11 = vsyncpa [#allocation6], 0
    %12 = vsyncpa [#allocation4], 0
    // Predicated region
    $region2: #{net_forward.1} parent=1 // pred_check
      _
    $region3: #{net_forward.1} parent=1 // pred_check_branch
      %14 = sbr.rel (0) target = $region5
    $region4: #{net_forward.1} parent=1 // pred_region
      %16 = vsyncadd [#allocation3], 0
      %s18 = sshll.u32 %s0, 4
      %s19 = int_to_ptr.hbm [resolvable:$true] %s18
      %s20 = sshll.u32 [#allocation2], 4
      %s21 = int_to_ptr.vmem [resolvable:$true] %s20
      %23 = dma.hbm_to_vmem [thread:$0]  %s19, 128, %s21, [#allocation3]
    $region5: #{net_forward.1} parent=1 // pred_fallthru
      _
    // Predicated region
    $region6: #{net_forward.1} parent=1 // pred_check
      _
    $region7: #{net_forward.1} parent=1 // pred_check_branch
      %25 = sbr.rel (0) target = $region9
    $region8: #{net_forward.1} parent=1 // pred_region
      %27 = vsyncadd [#allocation6], 0
      %s28 = sshll.u32 %s1, 4
      %s29 = int_to_ptr.hbm [resolvable:$true] %s28
      %s30 = sshll.u32 [#allocation5], 4
      %s31 = int_to_ptr.vmem [resolvable:$true] %s30
      %36 = dma.hbm_to_vmem [thread:$0]  %s29, 256, %s31, [#allocation6], 64, 64, 4
    $region9: #{net_forward.1} parent=1 // pred_fallthru
      _
    // Predicated region
    $region10: #{net_forward.1} parent=1 // pred_check
      _
    $region11: #{net_forward.1} parent=1 // pred_check_branch
      %38 = sbr.rel (0) target = $region13
    $region12: #{net_forward.1} parent=1 // pred_region
      _
    $region13: #{net_forward.1} parent=1 // pred_fallthru
      _
    // Predicated region
    $region14: #{net_forward.1} parent=1 // pred_check
      _
    $region15: #{net_forward.1} parent=1 // pred_check_branch
      %40 = sbr.rel (0) target = $region17
    $region16: #{net_forward.1} parent=1 // pred_region
      %42 = vsyncadd [#allocation6], 0
      %s43 = sshll.u32 %s3, 4
      %s44 = int_to_ptr.hbm [resolvable:$true] %s43
      %s45 = sshll.u32 [#allocation7], 4
      %s46 = int_to_ptr.vmem [resolvable:$true] %s45
      %51 = dma.hbm_to_vmem [thread:$0]  %s44, 1024, %s46, [#allocation6], 64, 64, 4
    $region17: #{net_forward.1} parent=1 // pred_fallthru
      _
    // Predicated region
    $region18: #{net_forward.1} parent=1 // pred_check
      _
    $region19: #{net_forward.1} parent=1 // pred_check_branch
      %53 = sbr.rel (0) target = $region21
    $region20: #{net_forward.1} parent=1 // pred_region
      _
    $region21: #{net_forward.1} parent=1 // pred_fallthru
      _
    // Predicated region
    $region22: #{net_forward.1} parent=1 // pred_check
      _
    $region23: #{net_forward.1} parent=1 // pred_check_branch
      %55 = sbr.rel (0) target = $region25
    $region24: #{net_forward.1} parent=1 // pred_region
      %57 = dma.done [#allocation3], 128
    $region25: #{net_forward.1} parent=1 // pred_fallthru
      _
    // Predicated region
    $region26: #{net_forward.1} parent=1 // pred_check
      _
    $region27: #{net_forward.1} parent=1 // pred_check_branch
      %59 = sbr.rel (0) target = $region29
    $region28: #{net_forward.1} parent=1 // pred_region
      %61 = dma.done [#allocation6], 256
    $region29: #{net_forward.1} parent=1 // pred_fallthru
      _
    // Predicated region
    $region30: #{net_forward.1} parent=1 // pred_check
      _
    $region31: #{net_forward.1} parent=1 // pred_check_branch
      %63 = sbr.rel (0) target = $region33
    $region32: #{net_forward.1} parent=1 // pred_region
      %65 = dma.done [#allocation6], 1024
    $region33: #{net_forward.1} parent=1 // pred_fallthru
      _
    %v67 = vld [vmem:[#allocation2] sm:$0xff]
    %v68 = vpack.c.bf16 %v67, %v67
    %v69 = vld [vmem:[#allocation5] sm:$0xf]
    %v70 = vld [vmem:[#allocation5 + $0x4] sm:$0xf]
    %v71 = vld [vmem:[#allocation5 + $0x8] sm:$0xf]
    %v72 = vld [vmem:[#allocation5 + $0xc] sm:$0xf]
    %v73 = vld [vmem:[%s2] sm:$0x1]
    %v75 = vperm.slane %v73, 0
    %v81 = vunpack.c.l.b16 %v69
    %v82 = vunpack.c.l.b16 %v70
    %v83 = vunpack.c.l.b16 %v71
    %v84 = vunpack.c.l.b16 %v72
    %v85 = vpack.c.b16 %v82, %v81
    %v86 = vpack.c.b16 %v84, %v83
    %vm89 = vcmask 261120
    %v91 = vsel %vm89, %v68, 0
    %93 = vmatpush.bf16.msra.mxu0 0
    %94 = vmatpush.bf16.msra.mxu0 0
    %95 = vmatpush.bf16.msra.mxu0 0
    %96 = vmatpush.bf16.msra.mxu0 0
    %97 = vmatpush.bf16.msra.mxu0 0
    %98 = vmatpush.bf16.msra.mxu0 0
    %99 = vmatpush.bf16.msra.mxu0 %v86
    %100 = vmatpush.bf16.msra.mxu0 %v85
    %101 = vmatmul.bf16.gmra.mxu0 %v91
    %v102 = vpop.f32.mrf.mxu0
    %v103 = vadd.f32 %v75, %v102
    %v104 = vpop.f32.mrf.mxu0
    %105 = vdwg.mxu0
    %v106 = vmax.f32 %v103, 0.0
    %v107 = vpack.c.bf16 %v106, %v106
    %v108 = vld [vmem:[#allocation7] sm:$0xf]
    %v109 = vld [vmem:[#allocation7 + $0x4] sm:$0xf]
    %v110 = vld [vmem:[#allocation7 + $0x8] sm:$0xf]
    %v111 = vld [vmem:[#allocation7 + $0xc] sm:$0xf]
    %v112 = vld [vmem:[#allocation7 + $0x10] sm:$0xf]
    %v113 = vld [vmem:[#allocation7 + $0x14] sm:$0xf]
    %v114 = vld [vmem:[#allocation7 + $0x18] sm:$0xf]
    %v115 = vld [vmem:[#allocation7 + $0x1c] sm:$0xf]
    %v116 = vld [vmem:[#allocation7 + $0x20] sm:$0xf]
    %v117 = vld [vmem:[#allocation7 + $0x24] sm:$0xf]
    %v118 = vld [vmem:[#allocation7 + $0x28] sm:$0xf]
    %v119 = vld [vmem:[#allocation7 + $0x2c] sm:$0xf]
    %v120 = vld [vmem:[#allocation7 + $0x30] sm:$0xf]
    %v121 = vld [vmem:[#allocation7 + $0x34] sm:$0xf]
    %v122 = vld [vmem:[#allocation7 + $0x38] sm:$0xf]
    %v123 = vld [vmem:[#allocation7 + $0x3c] sm:$0xf]
    %v140 = vunpack.c.l.b16 %v108
    %v141 = vunpack.c.l.b16 %v109
    %v142 = vunpack.c.l.b16 %v110
    %v143 = vunpack.c.l.b16 %v111
    %v144 = vunpack.c.l.b16 %v112
    %v145 = vunpack.c.l.b16 %v113
    %v146 = vunpack.c.l.b16 %v114
    %v147 = vunpack.c.l.b16 %v115
    %v148 = vunpack.c.l.b16 %v116
    %v149 = vunpack.c.l.b16 %v117
    %v150 = vunpack.c.l.b16 %v118
    %v151 = vunpack.c.l.b16 %v119
    %v152 = vunpack.c.l.b16 %v120
    %v153 = vunpack.c.l.b16 %v121
    %v154 = vunpack.c.l.b16 %v122
    %v155 = vunpack.c.l.b16 %v123
    %v156 = vpack.c.b16 %v141, %v140
    %v157 = vpack.c.b16 %v143, %v142
    %v158 = vpack.c.b16 %v145, %v144
    %v159 = vpack.c.b16 %v147, %v146
    %v160 = vpack.c.b16 %v149, %v148
    %v161 = vpack.c.b16 %v151, %v150
    %v162 = vpack.c.b16 %v153, %v152
    %v163 = vpack.c.b16 %v155, %v154
    %172 = vmatpush.bf16.msra.mxu0 %v163
    %173 = vmatpush.bf16.msra.mxu0 %v162
    %174 = vmatpush.bf16.msra.mxu0 %v161
    %175 = vmatpush.bf16.msra.mxu0 %v160
    %176 = vmatpush.bf16.msra.mxu0 %v159
    %177 = vmatpush.bf16.msra.mxu0 %v158
    %178 = vmatpush.bf16.msra.mxu0 %v157
    %179 = vmatpush.bf16.msra.mxu0 %v156
    %180 = vmatmul.bf16.gmra.mxu0 %v107
    %v181 = vpop.f32.mrf.mxu0
    %v182 = vadd.f32 0.0, %v181
    %v183 = vpop.f32.mrf.mxu0
    %184 = vdwg.mxu0
    %v185 = vld [vmem:[%s4] sm:$0x1]
    %v187 = vperm.slane %v185, 0
    %v189 = vadd.f32 %v182, %v187
    %vm190 = vcmask 130048
    %191 = vst.msk [vmem:[#allocation8] sm:$0xff] %vm190, %v189
    // Predicated region
    $region34: #{net_forward.1} parent=1 // pred_check
      _
    $region35: #{net_forward.1} parent=1 // pred_check_branch
      %193 = sbr.rel (0) target = $region37
    $region36: #{net_forward.1} parent=1 // pred_region
      %195 = vsyncadd [#allocation4], 0
      %s197 = sshll.u32 [#allocation8], 4
      %s198 = int_to_ptr.vmem [resolvable:$true] %s197
      %s199 = sshll.u32 %s5, 4
      %s200 = int_to_ptr.hbm [resolvable:$true] %s199
      %202 = dma.vmem_to_hbm [thread:$0]  %s198, 128, %s200, [#allocation4]
    $region37: #{net_forward.1} parent=1 // pred_fallthru
      _
    // Predicated region
    $region38: #{net_forward.1} parent=1 // pred_check
      _
    $region39: #{net_forward.1} parent=1 // pred_check_branch
      %204 = sbr.rel (0) target = $region41
    $region40: #{net_forward.1} parent=1 // pred_region
      %206 = dma.done [#allocation4], 128
    $region41: #{net_forward.1} parent=1 // pred_fallthru
      _
    %207 = vsyncpa [#allocation3], 1
    %208 = vsyncpa [#allocation6], 1
    %209 = vsyncpa [#allocation4], 1

</llo_original>
